<compile_context>
chip_gen: v7x
topology: tpu7x:2x2x1
jax: 0.10.0
libtpu: 0.0.40
codegen_flags: <defaults>
</compile_context>

<pallas_src>
import functools

import jax
import jax.numpy as jnp
from jax.experimental import pallas as pl
from jax.experimental.pallas import tpu as pltpu

LANE = 128


def _round_up(x, m):
    return ((x + m - 1) // m) * m


# ----------------------------- Pallas kernel --------------------------------
def fused_gcn_kernel(a_ref, x_ref, w1_ref, b1_ref, w2_ref, b2_ref, o_ref,
                     xw_ref, hw2_ref, *, block_rows):
    """Fused 2-layer GCN. Grid = (phase, row_tile), executed sequentially.

    a_ref  : [block_rows, N_pad]      bf16  A_hat row tile (phases 1,2; tile 0 in phase 0)
    x_ref  : [block_rows, F_in_pad]   bf16  X row tile (phase 0; tile 0 otherwise)
    w1_ref : [F_in_pad, F_hid_pad]    bf16  W1^T (resident)
    b1_ref : [1, F_hid_pad]           f32
    w2_ref : [F_hid_pad, F_out_pad]   bf16  W2^T (resident)
    b2_ref : [1, F_out_pad]           f32
    o_ref  : [block_rows, F_out_pad]  f32   output row tile (written in phase 2 only)
    xw_ref : [N_pad, F_hid_pad]       bf16  scratch: X @ W1^T
    hw2_ref: [N_pad, F_out_pad]       bf16  scratch: relu(A @ XW + b1) @ W2^T
    """
    phase = pl.program_id(0)
    tile = pl.program_id(1)
    row0 = pl.multiple_of(tile * block_rows, block_rows)

    @pl.when(phase == 0)
    def _feature_transform():
        # Layer-1 feature transform for this row tile of X (bf16 in, f32 accumulate).
        xw = jnp.dot(x_ref[...], w1_ref[...], preferred_element_type=jnp.float32)
        xw_ref[pl.ds(row0, block_rows), :] = xw.astype(xw_ref.dtype)

    @pl.when(phase == 1)
    def _layer1_aggregate_and_project():
        # Layer-1 aggregation for this A row tile, bias + ReLU, then layer-2 projection.
        h = jnp.dot(a_ref[...], xw_ref[...], preferred_element_type=jnp.float32)
        h = jnp.maximum(h + b1_ref[...], 0.0)
        hw2 = jnp.dot(h.astype(jnp.bfloat16), w2_ref[...],
                      preferred_element_type=jnp.float32)
        hw2_ref[pl.ds(row0, block_rows), :] = hw2.astype(hw2_ref.dtype)

    @pl.when(phase == 2)
    def _layer2_aggregate():
        out = jnp.dot(a_ref[...], hw2_ref[...], preferred_element_type=jnp.float32)
        o_ref[...] = (out + b2_ref[...]).astype(o_ref.dtype)


# ------------------------------- JAX glue ------------------------------------
def normalized_adjacency(edge_index, num_nodes):
    """Dense D^{-1/2}(A+I)D^{-1/2}, matching GCNConv's add_self_loops + sym-norm."""
    src = edge_index[0]
    dst = edge_index[1]
    a = jnp.zeros((num_nodes, num_nodes), jnp.float32)
    a = a.at[dst, src].add(1.0)                        # message flows src -> dst
    a = a + jnp.eye(num_nodes, dtype=jnp.float32)      # self loops
    deg = a.sum(axis=1)
    d_inv_sqrt = jnp.where(deg > 0, 1.0 / jnp.sqrt(deg), 0.0)
    return d_inv_sqrt[:, None] * a * d_inv_sqrt[None, :]


def gcn_forward(x, edge_index, params, *, block_rows=None):
    """relu(GCNConv1(x)) -> GCNConv2 fused in one Pallas call. Returns [N, output_dim] f32."""
    n, f_in = x.shape
    f_hid = params["w1"].shape[0]
    f_out = params["w2"].shape[0]

    if block_rows is None:
        # Per-generation tuning for large graphs: v5e/v6e (128 MiB VMEM) can take 512-1024
        # row tiles; v7x (64 MiB VMEM) should stay ~128-256 and set
        # pltpu.CompilerParams(vmem_limit_bytes=...) with headroom.
        block_rows = 256 if n >= 256 else _round_up(n, 16)
    # Multiple of 16 so bf16 scratch writes at dynamic sublane offsets are vreg-aligned.
    block_rows = _round_up(block_rows, 16)

    n_pad = _round_up(max(n, block_rows), block_rows)
    f_in_pad = _round_up(f_in, LANE)
    f_hid_pad = _round_up(f_hid, LANE)
    f_out_pad = _round_up(f_out, LANE)
    num_tiles = n_pad // block_rows

    # ---- one-time per-graph / per-parameter prep (host side, f32) -----------
    a_hat = normalized_adjacency(edge_index, n)
    a_p = jnp.zeros((n_pad, n_pad), jnp.float32).at[:n, :n].set(a_hat)
    x_p = jnp.zeros((n_pad, f_in_pad), jnp.float32).at[:n, :f_in].set(x)
    w1t = jnp.zeros((f_in_pad, f_hid_pad), jnp.float32).at[:f_in, :f_hid].set(params["w1"].T)
    w2t = jnp.zeros((f_hid_pad, f_out_pad), jnp.float32).at[:f_hid, :f_out].set(params["w2"].T)
    b1 = jnp.zeros((1, f_hid_pad), jnp.float32).at[0, :f_hid].set(params["b1"])
    b2 = jnp.zeros((1, f_out_pad), jnp.float32).at[0, :f_out].set(params["b2"])

    # bf16 MXU operands (f32 accumulation happens inside the kernel).
    a_bf = a_p.astype(jnp.bfloat16)
    x_bf = x_p.astype(jnp.bfloat16)
    w1_bf = w1t.astype(jnp.bfloat16)
    w2_bf = w2t.astype(jnp.bfloat16)

    out_padded = pl.pallas_call(
        functools.partial(fused_gcn_kernel, block_rows=block_rows),
        out_shape=jax.ShapeDtypeStruct((n_pad, f_out_pad), jnp.float32),
        grid_spec=pltpu.PrefetchScalarGridSpec(
            num_scalar_prefetch=0,
            grid=(3, num_tiles),
            in_specs=[
                # A_hat row tile: needed in phases 1 & 2. Phase 0 pins tile 0 so the block
                # index does not change -> its DMA is issued once then skipped (A streamed
                # ~2x total, not 3x).
                pl.BlockSpec((block_rows, n_pad),
                             lambda p, i: (jnp.where(p == 0, 0, i), 0)),
                # X row tile: needed in phase 0 only.
                pl.BlockSpec((block_rows, f_in_pad),
                             lambda p, i: (jnp.where(p == 0, i, 0), 0)),
                pl.BlockSpec((f_in_pad, f_hid_pad), lambda p, i: (0, 0)),
                pl.BlockSpec((1, f_hid_pad), lambda p, i: (0, 0)),
                pl.BlockSpec((f_hid_pad, f_out_pad), lambda p, i: (0, 0)),
                pl.BlockSpec((1, f_out_pad), lambda p, i: (0, 0)),
            ],
            # Output row tile is only produced in phase 2; earlier phases pin tile 0, so no
            # uninitialized block is ever written back and no block is revisited.
            out_specs=pl.BlockSpec((block_rows, f_out_pad),
                                   lambda p, i: (jnp.where(p == 2, i, 0), 0)),
            scratch_shapes=[
                pltpu.VMEM((n_pad, f_hid_pad), jnp.bfloat16),   # XW1
                pltpu.VMEM((n_pad, f_out_pad), jnp.bfloat16),   # relu(A@XW1+b1) @ W2
            ],
        ),
        compiler_params=pltpu.CompilerParams(
            # Row axis must stay "arbitrary": phases 1/2 consume scratch written by ALL
            # row tiles of the previous phase (see module docstring).
            dimension_semantics=("arbitrary", "arbitrary"),
        ),
    )(a_bf, x_bf, w1_bf, b1, w2_bf, b2)

    return out_padded[:n, :f_out]


def glorot(key, shape):
    fan_in, fan_out = shape[1], shape[0]
    limit = jnp.sqrt(6.0 / (fan_in + fan_out))
    return jax.random.uniform(key, shape, jnp.float32, -limit, limit)


# ------------------------------- references ----------------------------------
def gcn_forward_ref(x, edge_index, params):
    """Pure float32 reference."""
    a = normalized_adjacency(edge_index, x.shape[0])
    h = jnp.maximum(a @ (x @ params["w1"].T) + params["b1"], 0.0)
    return a @ (h @ params["w2"].T) + params["b2"]


def gcn_forward_ref_bf16(x, edge_index, params):
    """Reference mirroring the kernel's bf16-input / f32-accum / bf16-intermediate math."""
    bf = lambda t: t.astype(jnp.bfloat16).astype(jnp.float32)
    a = bf(normalized_adjacency(edge_index, x.shape[0]))
    xw = bf(bf(x) @ bf(params["w1"].T))
    h = jnp.maximum(a @ xw + params["b1"], 0.0)
    hw2 = bf(bf(h) @ bf(params["w2"].T))
    return a @ hw2 + params["b2"]


# --------------------------------- main ---------------------------------------
if __name__ == "__main__":
    # Small deterministic problem consistent with the module: N nodes with input_dim
    # features (stand-in for the CSV-derived matrix), hidden_dim=16, output_dim classes.
    num_nodes = 32
    input_dim = 32
    hidden_dim = 16
    output_dim = 4

    key = jax.random.PRNGKey(0)
    kx, k1, kb1, k2, kb2 = jax.random.split(key, 5)

    x = jax.random.normal(kx, (num_nodes, input_dim), jnp.float32)
    # Fixed edge_index from the script; remaining nodes only get self-loops.
    edge_index = jnp.array([[0, 1, 1, 2], [1, 0, 2, 1]], dtype=jnp.int32)

    params = {
        "w1": glorot(k1, (hidden_dim, input_dim)),
        "b1": 0.1 * jax.random.normal(kb1, (hidden_dim,), jnp.float32),
        "w2": glorot(k2, (output_dim, hidden_dim)),
        "b2": 0.1 * jax.random.normal(kb2, (output_dim,), jnp.float32),
    }

    # block_rows=16 -> 2 row tiles: exercises the (phase, row-tile) grid and scratch reuse.
    out = gcn_forward(x, edge_index, params, block_rows=16)
    out = jax.block_until_ready(out)
    assert out.shape == (num_nodes, output_dim)

    ref_bf16 = gcn_forward_ref_bf16(x, edge_index, params)  # same quantization as kernel
    ref_f32 = gcn_forward_ref(x, edge_index, params)        # pure float32 math
    assert jnp.allclose(out, ref_bf16, atol=5e-2, rtol=5e-2), "Pallas GCN mismatch vs bf16 ref"
    assert jnp.allclose(out, ref_f32, atol=1e-1, rtol=1e-1), "Pallas GCN mismatch vs f32 ref"

    print("KERNEL_OK")
</pallas_src>

<mosaic_0001>
module attributes {stable_mosaic.version = 11 : i64} {
  func.func @fused_gcn_kernel(%arg0: i32, %arg1: i32, %arg2: memref<16x32xbf16, #tpu.memory_space<vmem>>, %arg3: memref<16x128xbf16, #tpu.memory_space<vmem>>, %arg4: memref<128x128xbf16, #tpu.memory_space<vmem>>, %arg5: memref<1x128xf32, #tpu.memory_space<vmem>>, %arg6: memref<128x128xbf16, #tpu.memory_space<vmem>>, %arg7: memref<1x128xf32, #tpu.memory_space<vmem>>, %arg8: memref<16x128xf32, #tpu.memory_space<vmem>>, %arg9: memref<32x128xbf16, #tpu.memory_space<vmem>>, %arg10: memref<32x128xbf16, #tpu.memory_space<vmem>>) attributes {dimension_semantics = [#tpu.dimension_semantics<arbitrary>, #tpu.dimension_semantics<arbitrary>], iteration_bounds = array<i64: 3, 2>, scalar_prefetch = 0 : i64, scratch_operands = 2 : i64, tpu.core_type = #tpu.core_type<tc>, window_params = [{transform_indices = @transform_0, window_bounds = array<i64: 16, 32>}, {transform_indices = @transform_1, window_bounds = array<i64: 16, 128>}, {pipeline_mode = #tpu.pipeline_mode<synchronous>, transform_indices = @transform_2, window_bounds = array<i64: 128, 128>}, {pipeline_mode = #tpu.pipeline_mode<synchronous>, transform_indices = @transform_3, window_bounds = array<i64: 1, 128>}, {pipeline_mode = #tpu.pipeline_mode<synchronous>, transform_indices = @transform_4, window_bounds = array<i64: 128, 128>}, {pipeline_mode = #tpu.pipeline_mode<synchronous>, transform_indices = @transform_5, window_bounds = array<i64: 1, 128>}, {transform_indices = @transform_6, window_bounds = array<i64: 16, 128>}]} {
    %c16_i32 = arith.constant 16 : i32
    %0 = arith.muli %arg1, %c16_i32 : i32
    %1 = tpu.assume_multiple %0, 16 : i32
    %c0_i32 = arith.constant 0 : i32
    %2 = arith.cmpi eq, %arg0, %c0_i32 : i32
    %3 = arith.extui %2 : i1 to i32
    %c0_i32_0 = arith.constant 0 : i32
    %4 = arith.cmpi ne, %3, %c0_i32_0 : i32
    scf.if %4 {
      %c0 = arith.constant 0 : index
      %c0_3 = arith.constant 0 : index
      %11 = vector.load %arg3[%c0, %c0_3] : memref<16x128xbf16, #tpu.memory_space<vmem>>, vector<16x128xbf16>
      %c0_4 = arith.constant 0 : index
      %c0_5 = arith.constant 0 : index
      %12 = vector.load %arg4[%c0_4, %c0_5] : memref<128x128xbf16, #tpu.memory_space<vmem>>, vector<128x128xbf16>
      %cst = arith.constant dense<0.000000e+00> : vector<16x128xf32>
      %13 = tpu.matmul %11, %12, %cst {dimension_numbers = #tpu.dot_dimension_numbers<[1], [0], [0], [1], [0, 0, 1, 1], [], []>} : vector<16x128xbf16>, vector<128x128xbf16>, vector<16x128xf32> -> vector<16x128xf32>
      %14 = arith.truncf %13 : vector<16x128xf32> to vector<16x128xbf16>
      %15 = arith.index_cast %1 : i32 to index
      %c0_6 = arith.constant 0 : index
      %16 = vector.load %arg9[%15, %c0_6] : memref<32x128xbf16, #tpu.memory_space<vmem>>, vector<16x128xbf16>
      tpu.vector_store %arg9[%15, %c0_6], %14 {strides = array<i32>} : memref<32x128xbf16, #tpu.memory_space<vmem>>, vector<16x128xbf16>,
    } else {
    }
    %c1_i32 = arith.constant 1 : i32
    %5 = arith.cmpi eq, %arg0, %c1_i32 : i32
    %6 = arith.extui %5 : i1 to i32
    %c0_i32_1 = arith.constant 0 : i32
    %7 = arith.cmpi ne, %6, %c0_i32_1 : i32
    scf.if %7 {
      %c0 = arith.constant 0 : index
      %c0_3 = arith.constant 0 : index
      %11 = vector.load %arg2[%c0, %c0_3] : memref<16x32xbf16, #tpu.memory_space<vmem>>, vector<16x32xbf16>
      %c0_4 = arith.constant 0 : index
      %c0_5 = arith.constant 0 : index
      %12 = vector.load %arg9[%c0_4, %c0_5] : memref<32x128xbf16, #tpu.memory_space<vmem>>, vector<32x128xbf16>
      %cst = arith.constant dense<0.000000e+00> : vector<16x128xf32>
      %13 = tpu.matmul %11, %12, %cst {dimension_numbers = #tpu.dot_dimension_numbers<[1], [0], [0], [1], [0, 0, 1, 1], [], []>} : vector<16x32xbf16>, vector<32x128xbf16>, vector<16x128xf32> -> vector<16x128xf32>
      %c0_6 = arith.constant 0 : index
      %c0_7 = arith.constant 0 : index
      %14 = vector.load %arg5[%c0_6, %c0_7] : memref<1x128xf32, #tpu.memory_space<vmem>>, vector<1x128xf32>
      %15 = vector.broadcast %14 : vector<1x128xf32> to vector<16x128xf32>
      %16 = arith.addf %13, %15 : vector<16x128xf32>
      %cst_8 = arith.constant 0.000000e+00 : f32
      %17 = vector.broadcast %cst_8 : f32 to vector<16x128xf32>
      %18 = arith.maximumf %16, %17 : vector<16x128xf32>
      %19 = arith.truncf %18 : vector<16x128xf32> to vector<16x128xbf16>
      %c0_9 = arith.constant 0 : index
      %c0_10 = arith.constant 0 : index
      %20 = vector.load %arg6[%c0_9, %c0_10] : memref<128x128xbf16, #tpu.memory_space<vmem>>, vector<128x128xbf16>
      %cst_11 = arith.constant dense<0.000000e+00> : vector<16x128xf32>
      %21 = tpu.matmul %19, %20, %cst_11 {dimension_numbers = #tpu.dot_dimension_numbers<[1], [0], [0], [1], [0, 0, 1, 1], [], []>} : vector<16x128xbf16>, vector<128x128xbf16>, vector<16x128xf32> -> vector<16x128xf32>
      %22 = arith.truncf %21 : vector<16x128xf32> to vector<16x128xbf16>
      %23 = arith.index_cast %1 : i32 to index
      %c0_12 = arith.constant 0 : index
      %24 = vector.load %arg10[%23, %c0_12] : memref<32x128xbf16, #tpu.memory_space<vmem>>, vector<16x128xbf16>
      tpu.vector_store %arg10[%23, %c0_12], %22 {strides = array<i32>} : memref<32x128xbf16, #tpu.memory_space<vmem>>, vector<16x128xbf16>,
    } else {
    }
    %c2_i32 = arith.constant 2 : i32
    %8 = arith.cmpi eq, %arg0, %c2_i32 : i32
    %9 = arith.extui %8 : i1 to i32
    %c0_i32_2 = arith.constant 0 : i32
    %10 = arith.cmpi ne, %9, %c0_i32_2 : i32
    scf.if %10 {
      %c0 = arith.constant 0 : index
      %c0_3 = arith.constant 0 : index
      %11 = vector.load %arg2[%c0, %c0_3] : memref<16x32xbf16, #tpu.memory_space<vmem>>, vector<16x32xbf16>
      %c0_4 = arith.constant 0 : index
      %c0_5 = arith.constant 0 : index
      %12 = vector.load %arg10[%c0_4, %c0_5] : memref<32x128xbf16, #tpu.memory_space<vmem>>, vector<32x128xbf16>
      %cst = arith.constant dense<0.000000e+00> : vector<16x128xf32>
      %13 = tpu.matmul %11, %12, %cst {dimension_numbers = #tpu.dot_dimension_numbers<[1], [0], [0], [1], [0, 0, 1, 1], [], []>} : vector<16x32xbf16>, vector<32x128xbf16>, vector<16x128xf32> -> vector<16x128xf32>
      %c0_6 = arith.constant 0 : index
      %c0_7 = arith.constant 0 : index
      %14 = vector.load %arg7[%c0_6, %c0_7] : memref<1x128xf32, #tpu.memory_space<vmem>>, vector<1x128xf32>
      %15 = vector.broadcast %14 : vector<1x128xf32> to vector<16x128xf32>
      %16 = arith.addf %13, %15 : vector<16x128xf32>
      %c0_8 = arith.constant 0 : index
      %c0_9 = arith.constant 0 : index
      %17 = vector.load %arg8[%c0_8, %c0_9] : memref<16x128xf32, #tpu.memory_space<vmem>>, vector<16x128xf32>
      tpu.vector_store %arg8[%c0_8, %c0_9], %16 {strides = array<i32>} : memref<16x128xf32, #tpu.memory_space<vmem>>, vector<16x128xf32>,
    } else {
    }
    return
  }
  func.func @transform_0(%arg0: i32, %arg1: i32) -> (i32, i32) {
    %c0_i32 = arith.constant 0 : i32
    %0 = arith.cmpi eq, %arg0, %c0_i32 : i32
    %c0_i32_0 = arith.constant 0 : i32
    %1 = arith.select %0, %c0_i32_0, %arg1 : i32
    %c0_i32_1 = arith.constant 0 : i32
    %c0_i32_2 = arith.constant 0 : i32
    return %1, %c0_i32_1 : i32, i32
  }
  func.func @transform_1(%arg0: i32, %arg1: i32) -> (i32, i32) {
    %c0_i32 = arith.constant 0 : i32
    %0 = arith.cmpi eq, %arg0, %c0_i32 : i32
    %c0_i32_0 = arith.constant 0 : i32
    %1 = arith.select %0, %arg1, %c0_i32_0 : i32
    %c0_i32_1 = arith.constant 0 : i32
    %c0_i32_2 = arith.constant 0 : i32
    return %1, %c0_i32_1 : i32, i32
  }
  func.func @transform_2(%arg0: i32, %arg1: i32) -> (i32, i32) {
    %c0_i32 = arith.constant 0 : i32
    %c0_i32_0 = arith.constant 0 : i32
    %c0_i32_1 = arith.constant 0 : i32
    return %c0_i32, %c0_i32_0 : i32, i32
  }
  func.func @transform_3(%arg0: i32, %arg1: i32) -> (i32, i32) {
    %c0_i32 = arith.constant 0 : i32
    %c0_i32_0 = arith.constant 0 : i32
    %c0_i32_1 = arith.constant 0 : i32
    return %c0_i32, %c0_i32_0 : i32, i32
  }
  func.func @transform_4(%arg0: i32, %arg1: i32) -> (i32, i32) {
    %c0_i32 = arith.constant 0 : i32
    %c0_i32_0 = arith.constant 0 : i32
    %c0_i32_1 = arith.constant 0 : i32
    return %c0_i32, %c0_i32_0 : i32, i32
  }
  func.func @transform_5(%arg0: i32, %arg1: i32) -> (i32, i32) {
    %c0_i32 = arith.constant 0 : i32
    %c0_i32_0 = arith.constant 0 : i32
    %c0_i32_1 = arith.constant 0 : i32
    return %c0_i32, %c0_i32_0 : i32, i32
  }
  func.func @transform_6(%arg0: i32, %arg1: i32) -> (i32, i32) {
    %c2_i32 = arith.constant 2 : i32
    %0 = arith.cmpi eq, %arg0, %c2_i32 : i32
    %c0_i32 = arith.constant 0 : i32
    %1 = arith.select %0, %arg1, %c0_i32 : i32
    %c0_i32_0 = arith.constant 0 : i32
    %c0_i32_1 = arith.constant 0 : i32
    return %1, %c0_i32_0 : i32, i32
  }
}

</mosaic_0001>

<llo_original>
// kernel: tpu_custom_call.1
$region0: #{tpu_custom_call.1}
  #allocation0 [shape = 'u32[]', space=smem, size = 0x4, offset = 0x4, fixed_abs, tag = 'smem constant byte address 0x4 - core index']
  #allocation1 [shape = 'u32[144,128]{1,0:T(1,128)}', space=vmem, size = 0x12000, scoped, tag = 'internal scratch']
  #allocation2 [shape = 'bf16[32,128]{1,0:T(16,128)(2,1)}', space=vmem, size = 0x2000, scoped, tag = 'scratch operand']
  #allocation3 [shape = 'bf16[32,128]{1,0:T(16,128)(2,1)}', space=vmem, size = 0x2000, scoped, tag = 'scratch operand']
  %s0 = inlined_call_operand.hbm [shape: bf16[32,32], index: 0, kind: input, shape index: {}]
  %s1 = inlined_call_operand.hbm [shape: bf16[32,128], index: 1, kind: input, shape index: {}]
  %s2 = inlined_call_operand.hbm [shape: bf16[128,128], index: 2, kind: input, shape index: {}]
  %s3 = inlined_call_operand.vmem [shape: f32[1,128], index: 3, kind: input, shape index: {}]
  %s4 = inlined_call_operand.hbm [shape: bf16[128,128], index: 4, kind: input, shape index: {}]
  %s5 = inlined_call_operand.vmem [shape: f32[1,128], index: 5, kind: input, shape index: {}]
  %s6 = inlined_call_operand.hbm [shape: f32[32,128], index: 6, kind: output, shape index: {}]
  %s7 = sld [smem:[#allocation0]]
  $region85: #{tpu_custom_call.1} parent=0
    _
  %s9 = ssub.s32 1, %s7
  %s10 = scalar_select 0, %s9, %s7
  $region1: #{tpu_custom_call.1} parent=0
    #allocation4 [shape = 'u8[8192]{0}', space=vmem, size = 0x2000, scoped, tag = 'input window, operand 0']
    #allocation5 [shape = 's32[2]{0}', space=sflag, size = 0x8, scoped, tag = 'scoped memory for tpu_custom_call.1']
    #allocation6 [shape = 's32[2]{0}', space=sflag, size = 0x8, scoped, tag = 'scoped memory for tpu_custom_call.1']
    #allocation7 [shape = 'u8[8192]{0}', space=vmem, size = 0x2000, scoped, tag = 'input window, operand 1']
    #allocation8 [shape = 's32[2]{0}', space=sflag, size = 0x8, scoped, tag = 'scoped memory for tpu_custom_call.1']
    #allocation9 [shape = 'u8[32768]{0}', space=vmem, size = 0x8000, scoped, tag = 'input window, operand 2, single buffered']
    #allocation10 [shape = 'u8[32768]{0}', space=vmem, size = 0x8000, scoped, tag = 'input window, operand 4, single buffered']
    #allocation11 [shape = 's32[1]{0}', space=sflag, size = 0x4, scoped, tag = 'scoped memory for tpu_custom_call.1']
    #allocation12 [shape = 'u8[16384]{0}', space=vmem, size = 0x4000, scoped, tag = 'output window, operand 0']
    %11 = vsyncpa [#allocation5], 0
    %s12 = scalar_lea.sflag [#allocation5], 1
    %13 = vsyncpa %s12, 0
    %14 = vsyncpa [#allocation8], 0
    %s15 = scalar_lea.sflag [#allocation8], 1
    %16 = vsyncpa %s15, 0
    %17 = vsyncpa [#allocation11], 0
    %18 = vsyncpa [#allocation6], 0
    %s19 = scalar_lea.sflag [#allocation6], 1
    %20 = vsyncpa %s19, 0
    loop: start=0, step=1, limit=8
    $region2: #{tpu_custom_call.1} parent=1 // loop_pre_header
      _
    $region3: #{tpu_custom_call.1} parent=1 // loop_header
      %s22 = sphi 0, %s26
      %p23 = scmp.ge.s32.totalorder %s22, 8
      %s29 = sphi 0, %s41
      %s30 = sphi 0, %s37
      %s31 = sphi 0, %s29
      %s32 = sphi 0, %s30
      %s33 = sphi 0, %s31
      %s34 = sphi 0, %s32
      %s48 = sphi 0, %s50
      %s51 = sphi 0, %s48
      %s52 = sphi 0, %s51
      %s68 = sphi 0, %s52
      %s78 = sphi 0, %s80
      %s81 = sphi 0, %s78
      %s82 = sphi 0, %s81
      %s98 = sphi 0, %s82
      %s102 = sphi 0, %s102
      %s104 = sphi 0, %s102
      %s105 = sphi 0, %s104
      %s119 = sphi 0, %s105
      %s123 = sphi 0, %s123
      %s125 = sphi 0, %s123
      %s126 = sphi 0, %s125
      %s140 = sphi 0, %s126
      %s144 = sphi 0, %s144
      %s146 = sphi 0, %s144
      %s147 = sphi 0, %s146
      %s161 = sphi 0, %s147
      %s165 = sphi 0, %s165
      %s167 = sphi 0, %s165
      %s168 = sphi 0, %s167
      %s182 = sphi 0, %s168
      %s192 = sphi 0, %s194
      %s195 = sphi 0, %s192
      %s196 = sphi 0, %s195
      %s212 = sphi 0, %s196
    $region4: #{tpu_custom_call.1} parent=1 // loop_header_branch
      %25 = sbr.rel (%p23) target = $region8
    $region5: #{tpu_custom_call.1} parent=1 // loop_body
      %s27 = ssub.s32 %s22, 1
      %s28 = ssub.s32 %s22, 2
      %s35 = sadd.s32 1, %s30
      %p36 = scmp.ge.s32.totalorder %s35, 2
      %s37 = scalar_select %p36, 0, %s35
      %s38 = sadd.s32 1, %s29
      %s39 = scalar_select %p36, %s38, %s29
      %p40 = scmp.ge.s32.totalorder %s39, 3
      %s41 = scalar_select %p40, 0, %s39
      %p42 = scmp.eq.s32.totalorder %s29, 0
      %s43 = scalar_select %p42, 0, %s30
      %p44 = scmp.eq.s32.totalorder %s41, 0
      %s45 = scalar_select %p44, 0, %s37
      %s46 = ssub.s32 %s43, %s45
      %p47 = scmp.eq.s32.totalorder %s46, 0
      %s49 = sadd.s32 %s48, 1
      %s50 = scalar_select %p47, %s48, %s49
      %p53 = pneg %p47
      %p54 = scmp.eq.s32.totalorder %s22, 5
      %p55 = por %p53, %p54
      %p56 = scmp.ne.s32.totalorder %s48, %s51
      %p57 = scmp.eq.s32.totalorder %s22, 0
      %p58 = por %p56, %p57
      %p59 = scmp.ne.s32.totalorder %s48, %s51
      %p60 = scmp.eq.s32.totalorder %s27, 5
      %p61 = por %p59, %p60
      %p62 = scmp.ne.s32.totalorder %s51, %s52
      %p63 = scmp.eq.s32.totalorder %s27, 0
      %p64 = por %p62, %p63
      %p65 = scmp.ne.s32.totalorder %s51, %s52
      %p66 = scmp.eq.s32.totalorder %s28, 5
      %p67 = por %p65, %p66
      %p69 = scmp.ne.s32.totalorder %s52, %s68
      %p70 = scmp.eq.s32.totalorder %s28, 0
      %p71 = por %p69, %p70
      %p72 = scmp.eq.s32.totalorder %s29, 0
      %s73 = scalar_select %p72, %s30, 0
      %p74 = scmp.eq.s32.totalorder %s41, 0
      %s75 = scalar_select %p74, %s37, 0
      %s76 = ssub.s32 %s73, %s75
      %p77 = scmp.eq.s32.totalorder %s76, 0
      %s79 = sadd.s32 %s78, 1
      %s80 = scalar_select %p77, %s78, %s79
      %p83 = pneg %p77
      %p84 = scmp.eq.s32.totalorder %s22, 5
      %p85 = por %p83, %p84
      %p86 = scmp.ne.s32.totalorder %s78, %s81
      %p87 = scmp.eq.s32.totalorder %s22, 0
      %p88 = por %p86, %p87
      %p89 = scmp.ne.s32.totalorder %s78, %s81
      %p90 = scmp.eq.s32.totalorder %s27, 5
      %p91 = por %p89, %p90
      %p92 = scmp.ne.s32.totalorder %s81, %s82
      %p93 = scmp.eq.s32.totalorder %s27, 0
      %p94 = por %p92, %p93
      %p95 = scmp.ne.s32.totalorder %s81, %s82
      %p96 = scmp.eq.s32.totalorder %s28, 5
      %p97 = por %p95, %p96
      %p99 = scmp.ne.s32.totalorder %s82, %s98
      %p100 = scmp.eq.s32.totalorder %s28, 0
      %p101 = por %p99, %p100
      %s103 = sadd.s32 %s102, 1
      %p106 = scmp.eq.s32.totalorder %s22, 5
      %p107 = scmp.ne.s32.totalorder %s102, %s104
      %p108 = scmp.eq.s32.totalorder %s22, 0
      %p109 = por %p107, %p108
      %p110 = scmp.ne.s32.totalorder %s102, %s104
      %p111 = scmp.eq.s32.totalorder %s27, 5
      %p112 = por %p110, %p111
      %p113 = scmp.ne.s32.totalorder %s104, %s105
      %p114 = scmp.eq.s32.totalorder %s27, 0
      %p115 = por %p113, %p114
      %p116 = scmp.ne.s32.totalorder %s104, %s105
      %p117 = scmp.eq.s32.totalorder %s28, 5
      %p118 = por %p116, %p117
      %p120 = scmp.ne.s32.totalorder %s105, %s119
      %p121 = scmp.eq.s32.totalorder %s28, 0
      %p122 = por %p120, %p121
      %s124 = sadd.s32 %s123, 1
      %p127 = scmp.eq.s32.totalorder %s22, 5
      %p128 = scmp.ne.s32.totalorder %s123, %s125
      %p129 = scmp.eq.s32.totalorder %s22, 0
      %p130 = por %p128, %p129
      %p131 = scmp.ne.s32.totalorder %s123, %s125
      %p132 = scmp.eq.s32.totalorder %s27, 5
      %p133 = por %p131, %p132
      %p134 = scmp.ne.s32.totalorder %s125, %s126
      %p135 = scmp.eq.s32.totalorder %s27, 0
      %p136 = por %p134, %p135
      %p137 = scmp.ne.s32.totalorder %s125, %s126
      %p138 = scmp.eq.s32.totalorder %s28, 5
      %p139 = por %p137, %p138
      %p141 = scmp.ne.s32.totalorder %s126, %s140
      %p142 = scmp.eq.s32.totalorder %s28, 0
      %p143 = por %p141, %p142
      %s145 = sadd.s32 %s144, 1
      %p148 = scmp.eq.s32.totalorder %s22, 5
      %p149 = scmp.ne.s32.totalorder %s144, %s146
      %p150 = scmp.eq.s32.totalorder %s22, 0
      %p151 = por %p149, %p150
      %p152 = scmp.ne.s32.totalorder %s144, %s146
      %p153 = scmp.eq.s32.totalorder %s27, 5
      %p154 = por %p152, %p153
      %p155 = scmp.ne.s32.totalorder %s146, %s147
      %p156 = scmp.eq.s32.totalorder %s27, 0
      %p157 = por %p155, %p156
      %p158 = scmp.ne.s32.totalorder %s146, %s147
      %p159 = scmp.eq.s32.totalorder %s28, 5
      %p160 = por %p158, %p159
      %p162 = scmp.ne.s32.totalorder %s147, %s161
      %p163 = scmp.eq.s32.totalorder %s28, 0
      %p164 = por %p162, %p163
      %s166 = sadd.s32 %s165, 1
      %p169 = scmp.eq.s32.totalorder %s22, 5
      %p170 = scmp.ne.s32.totalorder %s165, %s167
      %p171 = scmp.eq.s32.totalorder %s22, 0
      %p172 = por %p170, %p171
      %p173 = scmp.ne.s32.totalorder %s165, %s167
      %p174 = scmp.eq.s32.totalorder %s27, 5
      %p175 = por %p173, %p174
      %p176 = scmp.ne.s32.totalorder %s167, %s168
      %p177 = scmp.eq.s32.totalorder %s27, 0
      %p178 = por %p176, %p177
      %p179 = scmp.ne.s32.totalorder %s167, %s168
      %p180 = scmp.eq.s32.totalorder %s28, 5
      %p181 = por %p179, %p180
      %p183 = scmp.ne.s32.totalorder %s168, %s182
      %p184 = scmp.eq.s32.totalorder %s28, 0
      %p185 = por %p183, %p184
      %p186 = scmp.eq.s32.totalorder %s29, 2
      %s187 = scalar_select %p186, %s30, 0
      %p188 = scmp.eq.s32.totalorder %s41, 2
      %s189 = scalar_select %p188, %s37, 0
      %s190 = ssub.s32 %s187, %s189
      %p191 = scmp.eq.s32.totalorder %s190, 0
      %s193 = sadd.s32 %s192, 1
      %s194 = scalar_select %p191, %s192, %s193
      %p197 = pneg %p191
      %p198 = scmp.eq.s32.totalorder %s22, 5
      %p199 = por %p197, %p198
      %p200 = scmp.ne.s32.totalorder %s192, %s195
      %p201 = scmp.eq.s32.totalorder %s22, 0
      %p202 = por %p200, %p201
      %p203 = scmp.ne.s32.totalorder %s192, %s195
      %p204 = scmp.eq.s32.totalorder %s27, 5
      %p205 = por %p203, %p204
      %p206 = scmp.ne.s32.totalorder %s195, %s196
      %p207 = scmp.eq.s32.totalorder %s27, 0
      %p208 = por %p206, %p207
      %p209 = scmp.ne.s32.totalorder %s195, %s196
      %p210 = scmp.eq.s32.totalorder %s28, 5
      %p211 = por %p209, %p210
      %p213 = scmp.ne.s32.totalorder %s196, %s212
      %p214 = scmp.eq.s32.totalorder %s28, 0
      %p215 = por %p213, %p214
      %p216 = scmp.le.s32.totalorder 1, %s22
      %p217 = scmp.lt.s32.totalorder %s22, 7
      %p218 = pnand %p216, %p217
      %p219 = pneg %p218
      // Predicated region
      $region9: #{tpu_custom_call.1} parent=5 // pred_check
        _
      $region10: #{tpu_custom_call.1} parent=5 // pred_check_branch
        %221 = sbr.rel (%p218) target = $region12
      $region11: #{tpu_custom_call.1} parent=5 // pred_region
        %s222 = ssub.s32 %s22, 1
        // Predicated region
        $region13: #{tpu_custom_call.1} parent=11 // pred_check
          %p223 = pneg %p115
        $region14: #{tpu_custom_call.1} parent=11 // pred_check_branch
          %225 = sbr.rel (%p223) target = $region16
        $region15: #{tpu_custom_call.1} parent=11 // pred_region
          %s227 = ssub.s32 1024, 1024
          %228 = vsyncadd [#allocation8], %s227
          %s229 = sshll.u32 [#allocation9], 4
          %s230 = int_to_ptr.vmem [resolvable:$true] %s229
          %235 = dma.hbm_to_vmem [thread:$0]  %s2, 1024, %s230, [#allocation8], 64, 64, 4
        $region16: #{tpu_custom_call.1} parent=11 // pred_fallthru
          _
        // Predicated region
        $region17: #{tpu_custom_call.1} parent=11 // pred_check
          %p236 = pneg %p136
        $region18: #{tpu_custom_call.1} parent=11 // pred_check_branch
          %238 = sbr.rel (%p236) target = $region20
        $region19: #{tpu_custom_call.1} parent=11 // pred_region
          _
        $region20: #{tpu_custom_call.1} parent=11 // pred_fallthru
          _
        // Predicated region
        $region21: #{tpu_custom_call.1} parent=11 // pred_check
          %p239 = pneg %p157
        $region22: #{tpu_custom_call.1} parent=11 // pred_check_branch
          %241 = sbr.rel (%p239) target = $region24
        $region23: #{tpu_custom_call.1} parent=11 // pred_region
          %s243 = ssub.s32 1024, 1024
          %244 = vsyncadd [#allocation11], %s243
          %s245 = sshll.u32 [#allocation10], 4
          %s246 = int_to_ptr.vmem [resolvable:$true] %s245
          %251 = dma.hbm_to_vmem [thread:$0]  %s4, 1024, %s246, [#allocation11], 64, 64, 4
        $region24: #{tpu_custom_call.1} parent=11 // pred_fallthru
          _
        // Predicated region
        $region25: #{tpu_custom_call.1} parent=11 // pred_check
          %p252 = pneg %p178
        $region26: #{tpu_custom_call.1} parent=11 // pred_check_branch
          %254 = sbr.rel (%p252) target = $region28
        $region27: #{tpu_custom_call.1} parent=11 // pred_region
          _
        $region28: #{tpu_custom_call.1} parent=11 // pred_fallthru
          _
      $region12: #{tpu_custom_call.1} parent=5 // pred_fallthru
        _
      %p255 = scmp.lt.s32.totalorder %s22, 6
      // Predicated region
      $region29: #{tpu_custom_call.1} parent=5 // pred_check
        %p256 = pneg %p255
      $region30: #{tpu_custom_call.1} parent=5 // pred_check_branch
        %258 = sbr.rel (%p256) target = $region32
      $region31: #{tpu_custom_call.1} parent=5 // pred_region
        // Predicated region
        $region33: #{tpu_custom_call.1} parent=31 // pred_check
          %p259 = pneg %p58
        $region34: #{tpu_custom_call.1} parent=31 // pred_check_branch
          %261 = sbr.rel (%p259) target = $region36
        $region35: #{tpu_custom_call.1} parent=31 // pred_region
          %s262 = sand.u32 %s48, 1
          %s263 = scalar_lea.sflag [#allocation5], %s262
          %s264 = sand.u32 %s48, 1
          %s265 = smul.addr %s264, 8
          %s266 = scalar_lea.vmem [#allocation4], %s265
          %p267 = scmp.eq.s32.totalorder %s29, 0
          %s268 = scalar_select %p267, 0, %s30
          %s269 = smul.u32 2, %s268
          %s271 = ssub.s32 128, 128
          %272 = vsyncadd %s263, %s271
          %s273 = smul.addr %s269, 64
          %s274 = scalar_lea.hbm %s0, %s273
          %s275 = sshll.u32 %s266, 4
          %s276 = int_to_ptr.vmem [resolvable:$true] %s275
          %281 = dma.hbm_to_vmem [thread:$0]  %s274, 128, %s276, %s263, 64, 64, 4
        $region36: #{tpu_custom_call.1} parent=31 // pred_fallthru
          _
        // Predicated region
        $region37: #{tpu_custom_call.1} parent=31 // pred_check
          %p282 = pneg %p88
        $region38: #{tpu_custom_call.1} parent=31 // pred_check_branch
          %284 = sbr.rel (%p282) target = $region40
        $region39: #{tpu_custom_call.1} parent=31 // pred_region
          %s285 = sand.u32 %s22, 1
          %s286 = scalar_lea.sflag [#allocation8], %s285
          %s287 = sand.u32 %s78, 1
          %s288 = smul.addr %s287, 8
          %s289 = scalar_lea.vmem [#allocation7], %s288
          %p290 = scmp.eq.s32.totalorder %s29, 0
          %s291 = scalar_select %p290, %s30, 0
          %s292 = smul.u32 2, %s291
          %s294 = ssub.s32 128, 128
          %295 = vsyncadd %s286, %s294
          %s296 = smul.addr %s292, 64
          %s297 = scalar_lea.hbm %s1, %s296
          %s298 = sshll.u32 %s289, 4
          %s299 = int_to_ptr.vmem [resolvable:$true] %s298
          %304 = dma.hbm_to_vmem [thread:$0]  %s297, 128, %s299, %s286, 64, 64, 4
        $region40: #{tpu_custom_call.1} parent=31 // pred_fallthru
          _
      $region32: #{tpu_custom_call.1} parent=5 // pred_fallthru
        _
      %p305 = scmp.le.s32.totalorder 1, %s22
      %p306 = scmp.lt.s32.totalorder %s22, 7
      %p307 = pnand %p305, %p306
      %p308 = pneg %p307
      // Predicated region
      $region41: #{tpu_custom_call.1} parent=5 // pred_check
        _
      $region42: #{tpu_custom_call.1} parent=5 // pred_check_branch
        %310 = sbr.rel (%p307) target = $region44
      $region43: #{tpu_custom_call.1} parent=5 // pred_region
        %s311 = ssub.s32 %s22, 1
        %s312 = sand.u32 %s51, 1
        %s313 = scalar_lea.sflag [#allocation5], %s312
        %s314 = sand.u32 %s51, 1
        %s315 = smul.addr %s314, 8
        %s316 = scalar_lea.vmem [#allocation4], %s315
        // Predicated region
        $region45: #{tpu_custom_call.1} parent=43 // pred_check
          %p317 = pneg %p64
        $region46: #{tpu_custom_call.1} parent=43 // pred_check_branch
          %319 = sbr.rel (%p317) target = $region48
        $region47: #{tpu_custom_call.1} parent=43 // pred_region
          %320 = dma.done %s313, 128
        $region48: #{tpu_custom_call.1} parent=43 // pred_fallthru
          _
        %s321 = sand.u32 %s27, 1
        %s322 = scalar_lea.sflag [#allocation8], %s321
        %s323 = sand.u32 %s81, 1
        %s324 = smul.addr %s323, 8
        %s325 = scalar_lea.vmem [#allocation7], %s324
        // Predicated region
        $region49: #{tpu_custom_call.1} parent=43 // pred_check
          %p326 = pneg %p94
        $region50: #{tpu_custom_call.1} parent=43 // pred_check_branch
          %328 = sbr.rel (%p326) target = $region52
        $region51: #{tpu_custom_call.1} parent=43 // pred_region
          %329 = dma.done %s322, 128
        $region52: #{tpu_custom_call.1} parent=43 // pred_fallthru
          _
        // Predicated region
        $region53: #{tpu_custom_call.1} parent=43 // pred_check
          %p330 = pneg %p115
        $region54: #{tpu_custom_call.1} parent=43 // pred_check_branch
          %332 = sbr.rel (%p330) target = $region56
        $region55: #{tpu_custom_call.1} parent=43 // pred_region
          %333 = dma.done [#allocation8], 1024
        $region56: #{tpu_custom_call.1} parent=43 // pred_fallthru
          _
        // Predicated region
        $region57: #{tpu_custom_call.1} parent=43 // pred_check
          %p334 = pneg %p157
        $region58: #{tpu_custom_call.1} parent=43 // pred_check_branch
          %336 = sbr.rel (%p334) target = $region60
        $region59: #{tpu_custom_call.1} parent=43 // pred_region
          %337 = dma.done [#allocation11], 1024
        $region60: #{tpu_custom_call.1} parent=43 // pred_fallthru
          _
        %s338 = sand.u32 %s51, 1
        %s339 = scalar_lea.sflag [#allocation5], %s338
        %s340 = sand.u32 %s51, 1
        %s341 = smul.addr %s340, 8
        %s342 = scalar_lea.vmem [#allocation4], %s341
        %p343 = pneg %p64
        %p344 = pneg %p61
        %s345 = sand.u32 %s27, 1
        %s346 = scalar_lea.sflag [#allocation8], %s345
        %s347 = sand.u32 %s81, 1
        %s348 = smul.addr %s347, 8
        %s349 = scalar_lea.vmem [#allocation7], %s348
        %p350 = pneg %p94
        %p351 = pneg %p91
        %p352 = pneg %p115
        %p353 = pneg %p112
        %p354 = pneg %p136
        %p355 = pneg %p133
        %p356 = pneg %p157
        %p357 = pneg %p154
        %p358 = pneg %p178
        %p359 = pneg %p175
        %p360 = pneg %p208
        %p361 = pneg %p205
        %s362 = sand.u32 %s195, 1
        %s363 = scalar_lea.sflag [#allocation6], %s362
        %s364 = sand.u32 %s195, 1
        %s365 = smul.addr %s364, 16
        %s366 = scalar_lea.vmem [#allocation12], %s365
        %p367 = scmp.eq.s32.totalorder %s31, 0
        %s368 = scalar_select %p367, 0, %s32
        %s369 = smul.u32 2, %s368
        %p370 = scmp.eq.s32.totalorder %s31, 0
        %s371 = scalar_select %p370, %s32, 0
        %s372 = smul.u32 2, %s371
        %p373 = scmp.eq.s32.totalorder %s31, 2
        %s374 = scalar_select %p373, %s32, 0
        %s375 = smul.u32 2, %s374
        %s377 = smul.u32 %s32, 16
        %p378 = scmp.eq.s32.totalorder %s31, 0
        // Predicated region
        $region61: #{tpu_custom_call.1} parent=43 // pred_check
          %p379 = pneg %p378
        $region62: #{tpu_custom_call.1} parent=43 // pred_check_branch
          %381 = sbr.rel (%p379) target = $region64
        $region63: #{tpu_custom_call.1} parent=43 // pred_region
          %v382 = vld [vmem:[%s325] sm:$0xf]
          %v383 = vld [vmem:[%s325 + $0x4] sm:$0xf]
          %v384 = vld [vmem:[#allocation9] sm:$0xf]
          %v385 = vld [vmem:[#allocation9 + $0x4] sm:$0xf]
          %v386 = vld [vmem:[#allocation9 + $0x8] sm:$0xf]
          %v387 = vld [vmem:[#allocation9 + $0xc] sm:$0xf]
          %v388 = vld [vmem:[#allocation9 + $0x10] sm:$0xf]
          %v389 = vld [vmem:[#allocation9 + $0x14] sm:$0xf]
          %v390 = vld [vmem:[#allocation9 + $0x18] sm:$0xf]
          %v391 = vld [vmem:[#allocation9 + $0x1c] sm:$0xf]
          %v392 = vld [vmem:[#allocation9 + $0x20] sm:$0xf]
          %v393 = vld [vmem:[#allocation9 + $0x24] sm:$0xf]
          %v394 = vld [vmem:[#allocation9 + $0x28] sm:$0xf]
          %v395 = vld [vmem:[#allocation9 + $0x2c] sm:$0xf]
          %v396 = vld [vmem:[#allocation9 + $0x30] sm:$0xf]
          %v397 = vld [vmem:[#allocation9 + $0x34] sm:$0xf]
          %v398 = vld [vmem:[#allocation9 + $0x38] sm:$0xf]
          %v399 = vld [vmem:[#allocation9 + $0x3c] sm:$0xf]
          %v402 = vunpack.c.l.b16 %v382
          %v403 = vunpack.c.l.b16 %v383
          %v404 = vpack.c.b16 %v403, %v402
          %v422 = vunpack.c.l.b16 %v384
          %v423 = vunpack.c.l.b16 %v385
          %v424 = vunpack.c.l.b16 %v386
          %v425 = vunpack.c.l.b16 %v387
          %v426 = vunpack.c.l.b16 %v388
          %v427 = vunpack.c.l.b16 %v389
          %v428 = vunpack.c.l.b16 %v390
          %v429 = vunpack.c.l.b16 %v391
          %v430 = vunpack.c.l.b16 %v392
          %v431 = vunpack.c.l.b16 %v393
          %v432 = vunpack.c.l.b16 %v394
          %v433 = vunpack.c.l.b16 %v395
          %v434 = vunpack.c.l.b16 %v396
          %v435 = vunpack.c.l.b16 %v397
          %v436 = vunpack.c.l.b16 %v398
          %v437 = vunpack.c.l.b16 %v399
          %v438 = vpack.c.b16 %v423, %v422
          %v439 = vpack.c.b16 %v425, %v424
          %v440 = vpack.c.b16 %v427, %v426
          %v441 = vpack.c.b16 %v429, %v428
          %v442 = vpack.c.b16 %v431, %v430
          %v443 = vpack.c.b16 %v433, %v432
          %v444 = vpack.c.b16 %v435, %v434
          %v445 = vpack.c.b16 %v437, %v436
          %454 = vmatprep.subr.bf16.mxu0 0
          %455 = vmatpush1.bf16.msra.mxu0 %v438
          %456 = vmatprep.subr.bf16.mxu0 0
          %457 = vmatpush1.bf16.msra.mxu0 %v439
          %458 = vmatprep.subr.bf16.mxu0 0
          %459 = vmatpush1.bf16.msra.mxu0 %v440
          %460 = vmatprep.subr.bf16.mxu0 0
          %461 = vmatpush1.bf16.msra.mxu0 %v441
          %462 = vmatprep.subr.bf16.mxu0 0
          %463 = vmatpush1.bf16.msra.mxu0 %v442
          %464 = vmatprep.subr.bf16.mxu0 0
          %465 = vmatpush1.bf16.msra.mxu0 %v443
          %466 = vmatprep.subr.bf16.mxu0 0
          %467 = vmatpush1.bf16.msra.mxu0 %v444
          %468 = vmatprep.subr.bf16.mxu0 0
          %469 = vmatpush1.bf16.msra.mxu0 %v445
          %470 = vmatprep.subr.bf16.mxu0 0
          %471 = vmatpush1.bf16.msra.mxu0 0
          %472 = vmatprep.subr.bf16.mxu0 0
          %473 = vmatpush1.bf16.msra.mxu0 0
          %474 = vmatprep.subr.bf16.mxu0 0
          %475 = vmatpush1.bf16.msra.mxu0 0
          %476 = vmatprep.subr.bf16.mxu0 0
          %477 = vmatpush1.bf16.msra.mxu0 0
          %478 = vmatprep.subr.bf16.mxu0 0
          %479 = vmatpush1.bf16.msra.mxu0 0
          %480 = vmatprep.subr.bf16.mxu0 0
          %481 = vmatpush1.bf16.msra.mxu0 0
          %482 = vmatprep.subr.bf16.mxu0 0
          %483 = vmatpush1.bf16.msra.mxu0 0
          %484 = vmatprep.subr.bf16.mxu0 0
          %485 = vmatpush1.bf16.msra.mxu0 0
          %486 = vmatprep.mubr.bf16.mxu0 0
          %487 = vmatmul.mubr.bf16.gmra.mrb[0].mxu0 %v404
          %v488 = vpop.f32.mrb[0].mxu0
          %v489 = vadd.f32 0.0, %v488
          %v490 = vpop.f32.mrb[0].mxu0
          %v491 = vpop.f32.mrb[0].mxu0
          %v492 = vadd.f32 0.0, %v491
          %v493 = vpop.f32.mrb[0].mxu0
          %494 = vdwg.mxu0
          %v495 = vpack.c.bf16 %v492, %v489
          %s496 = sshra.s32 %s377, 4
          %s497 = sand.u32 %s377, 15
          %s498 = smul.addr %s496, 8
          %s499 = scalar_lea.vmem [#allocation2], %s498
          %500 = vst [vmem:[%s499] sm:$0xff] %v495
        $region64: #{tpu_custom_call.1} parent=43 // pred_fallthru
          _
        %p501 = scmp.eq.s32.totalorder %s31, 1
        // Predicated region
        $region65: #{tpu_custom_call.1} parent=43 // pred_check
          %p502 = pneg %p501
        $region66: #{tpu_custom_call.1} parent=43 // pred_check_branch
          %504 = sbr.rel (%p502) target = $region68
        $region67: #{tpu_custom_call.1} parent=43 // pred_region
          %v505 = vld [vmem:[%s316] sm:$0xf]
          %v506 = vld [vmem:[%s316 + $0x4] sm:$0xf]
          %v507 = vld [vmem:[#allocation2] sm:$0xff]
          %v508 = vld [vmem:[#allocation2 + $0x8] sm:$0xff]
          %v509 = vld [vmem:[%s3] sm:$0x1]
          %v511 = vlaneseq
          %v512 = vshrl.u32 %v511, 7
          %v513 = vsub.s32 0, %v512
          %v514 = vrot.slane %v509, %v513
          %v518 = vunpack.c.l.b16 %v505
          %v519 = vunpack.c.l.b16 %v506
          %v520 = vpack.c.b16 %v519, %v518
          %vm521 = vcmask 261120
          %v523 = vsel %vm521, %v520, 0
          %525 = vmatprep.subr.bf16.mxu0 0
          %526 = vmatpush1.bf16.msra.mxu0 %v507
          %527 = vmatprep.subr.bf16.mxu0 0
          %528 = vmatpush1.bf16.msra.mxu0 %v508
          %529 = vmatprep.subr.bf16.mxu0 0
          %530 = vmatpush1.bf16.msra.mxu0 0
          %531 = vmatprep.subr.bf16.mxu0 0
          %532 = vmatpush1.bf16.msra.mxu0 0
          %533 = vmatprep.subr.bf16.mxu0 0
          %534 = vmatpush1.bf16.msra.mxu0 0
          %535 = vmatprep.subr.bf16.mxu0 0
          %536 = vmatpush1.bf16.msra.mxu0 0
          %537 = vmatprep.subr.bf16.mxu0 0
          %538 = vmatpush1.bf16.msra.mxu0 0
          %539 = vmatprep.subr.bf16.mxu0 0
          %540 = vmatpush1.bf16.msra.mxu0 0
          %541 = vmatprep.subr.bf16.mxu0 0
          %542 = vmatpush1.bf16.msra.mxu0 0
          %543 = vmatprep.subr.bf16.mxu0 0
          %544 = vmatpush1.bf16.msra.mxu0 0
          %545 = vmatprep.subr.bf16.mxu0 0
          %546 = vmatpush1.bf16.msra.mxu0 0
          %547 = vmatprep.subr.bf16.mxu0 0
          %548 = vmatpush1.bf16.msra.mxu0 0
          %549 = vmatprep.subr.bf16.mxu0 0
          %550 = vmatpush1.bf16.msra.mxu0 0
          %551 = vmatprep.subr.bf16.mxu0 0
          %552 = vmatpush1.bf16.msra.mxu0 0
          %553 = vmatprep.subr.bf16.mxu0 0
          %554 = vmatpush1.bf16.msra.mxu0 0
          %555 = vmatprep.subr.bf16.mxu0 0
          %556 = vmatpush1.bf16.msra.mxu0 0
          %557 = vmatprep.mubr.bf16.mxu0 0
          %558 = vmatmul.mubr.bf16.gmra.mrb[0].mxu0 %v523
          %v559 = vpop.f32.mrb[0].mxu0
          %v560 = vadd.f32 %v514, %v559
          %v561 = vpop.f32.mrb[0].mxu0
          %v562 = vpop.f32.mrb[0].mxu0
          %v563 = vadd.f32 %v514, %v562
          %v564 = vpop.f32.mrb[0].mxu0
          %565 = vdwg.mxu0
          %v566 = vmax.f32 %v560, 0.0
          %v567 = vmax.f32 %v563, 0.0
          %v568 = vpack.c.bf16 %v567, %v566
          %v569 = vld [vmem:[#allocation10] sm:$0xf]
          %v570 = vld [vmem:[#allocation10 + $0x4] sm:$0xf]
          %v571 = vld [vmem:[#allocation10 + $0x8] sm:$0xf]
          %v572 = vld [vmem:[#allocation10 + $0xc] sm:$0xf]
          %v573 = vld [vmem:[#allocation10 + $0x10] sm:$0xf]
          %v574 = vld [vmem:[#allocation10 + $0x14] sm:$0xf]
          %v575 = vld [vmem:[#allocation10 + $0x18] sm:$0xf]
          %v576 = vld [vmem:[#allocation10 + $0x1c] sm:$0xf]
          %v577 = vld [vmem:[#allocation10 + $0x20] sm:$0xf]
          %v578 = vld [vmem:[#allocation10 + $0x24] sm:$0xf]
          %v579 = vld [vmem:[#allocation10 + $0x28] sm:$0xf]
          %v580 = vld [vmem:[#allocation10 + $0x2c] sm:$0xf]
          %v581 = vld [vmem:[#allocation10 + $0x30] sm:$0xf]
          %v582 = vld [vmem:[#allocation10 + $0x34] sm:$0xf]
          %v583 = vld [vmem:[#allocation10 + $0x38] sm:$0xf]
          %v584 = vld [vmem:[#allocation10 + $0x3c] sm:$0xf]
          %v601 = vunpack.c.l.b16 %v569
          %v602 = vunpack.c.l.b16 %v570
          %v603 = vunpack.c.l.b16 %v571
          %v604 = vunpack.c.l.b16 %v572
          %v605 = vunpack.c.l.b16 %v573
          %v606 = vunpack.c.l.b16 %v574
          %v607 = vunpack.c.l.b16 %v575
          %v608 = vunpack.c.l.b16 %v576
          %v609 = vunpack.c.l.b16 %v577
          %v610 = vunpack.c.l.b16 %v578
          %v611 = vunpack.c.l.b16 %v579
          %v612 = vunpack.c.l.b16 %v580
          %v613 = vunpack.c.l.b16 %v581
          %v614 = vunpack.c.l.b16 %v582
          %v615 = vunpack.c.l.b16 %v583
          %v616 = vunpack.c.l.b16 %v584
          %v617 = vpack.c.b16 %v602, %v601
          %v618 = vpack.c.b16 %v604, %v603
          %v619 = vpack.c.b16 %v606, %v605
          %v620 = vpack.c.b16 %v608, %v607
          %v621 = vpack.c.b16 %v610, %v609
          %v622 = vpack.c.b16 %v612, %v611
          %v623 = vpack.c.b16 %v614, %v613
          %v624 = vpack.c.b16 %v616, %v615
          %633 = vmatprep.subr.bf16.mxu0 0
          %634 = vmatpush1.bf16.msra.mxu0 %v617
          %635 = vmatprep.subr.bf16.mxu0 0
          %636 = vmatpush1.bf16.msra.mxu0 %v618
          %637 = vmatprep.subr.bf16.mxu0 0
          %638 = vmatpush1.bf16.msra.mxu0 %v619
          %639 = vmatprep.subr.bf16.mxu0 0
          %640 = vmatpush1.bf16.msra.mxu0 %v620
          %641 = vmatprep.subr.bf16.mxu0 0
          %642 = vmatpush1.bf16.msra.mxu0 %v621
          %643 = vmatprep.subr.bf16.mxu0 0
          %644 = vmatpush1.bf16.msra.mxu0 %v622
          %645 = vmatprep.subr.bf16.mxu0 0
          %646 = vmatpush1.bf16.msra.mxu0 %v623
          %647 = vmatprep.subr.bf16.mxu0 0
          %648 = vmatpush1.bf16.msra.mxu0 %v624
          %649 = vmatprep.subr.bf16.mxu0 0
          %650 = vmatpush1.bf16.msra.mxu0 0
          %651 = vmatprep.subr.bf16.mxu0 0
          %652 = vmatpush1.bf16.msra.mxu0 0
          %653 = vmatprep.subr.bf16.mxu0 0
          %654 = vmatpush1.bf16.msra.mxu0 0
          %655 = vmatprep.subr.bf16.mxu0 0
          %656 = vmatpush1.bf16.msra.mxu0 0
          %657 = vmatprep.subr.bf16.mxu0 0
          %658 = vmatpush1.bf16.msra.mxu0 0
          %659 = vmatprep.subr.bf16.mxu0 0
          %660 = vmatpush1.bf16.msra.mxu0 0
          %661 = vmatprep.subr.bf16.mxu0 0
          %662 = vmatpush1.bf16.msra.mxu0 0
          %663 = vmatprep.subr.bf16.mxu0 0
          %664 = vmatpush1.bf16.msra.mxu0 0
          %665 = vmatprep.mubr.bf16.mxu0 0
          %666 = vmatmul.mubr.bf16.gmra.mrb[0].mxu0 %v568
          %v667 = vpop.f32.mrb[0].mxu0
          %v668 = vadd.f32 0.0, %v667
          %v669 = vpop.f32.mrb[0].mxu0
          %v670 = vpop.f32.mrb[0].mxu0
          %v671 = vadd.f32 0.0, %v670
          %v672 = vpop.f32.mrb[0].mxu0
          %673 = vdwg.mxu0
          %v674 = vpack.c.bf16 %v671, %v668
          %s675 = sshra.s32 %s377, 4
          %s676 = sand.u32 %s377, 15
          %s677 = smul.addr %s675, 8
          %s678 = scalar_lea.vmem [#allocation3], %s677
          %679 = vst [vmem:[%s678] sm:$0xff] %v674
        $region68: #{tpu_custom_call.1} parent=43 // pred_fallthru
          _
        %p680 = scmp.eq.s32.totalorder %s31, 2
        // Predicated region
        $region69: #{tpu_custom_call.1} parent=43 // pred_check
          %p681 = pneg %p680
        $region70: #{tpu_custom_call.1} parent=43 // pred_check_branch
          %683 = sbr.rel (%p681) target = $region72
        $region71: #{tpu_custom_call.1} parent=43 // pred_region
          %v684 = vld [vmem:[%s316] sm:$0xf]
          %v685 = vld [vmem:[%s316 + $0x4] sm:$0xf]
          %v686 = vld [vmem:[#allocation3] sm:$0xff]
          %v687 = vld [vmem:[#allocation3 + $0x8] sm:$0xff]
          %v688 = vld [vmem:[%s5] sm:$0x1]
          %v690 = vlaneseq
          %v691 = vshrl.u32 %v690, 7
          %v692 = vsub.s32 0, %v691
          %v693 = vrot.slane %v688, %v692
          %v697 = vunpack.c.l.b16 %v684
          %v698 = vunpack.c.l.b16 %v685
          %v699 = vpack.c.b16 %v698, %v697
          %vm700 = vcmask 261120
          %v702 = vsel %vm700, %v699, 0
          %704 = vmatprep.subr.bf16.mxu0 0
          %705 = vmatpush1.bf16.msra.mxu0 %v686
          %706 = vmatprep.subr.bf16.mxu0 0
          %707 = vmatpush1.bf16.msra.mxu0 %v687
          %708 = vmatprep.subr.bf16.mxu0 0
          %709 = vmatpush1.bf16.msra.mxu0 0
          %710 = vmatprep.subr.bf16.mxu0 0
          %711 = vmatpush1.bf16.msra.mxu0 0
          %712 = vmatprep.subr.bf16.mxu0 0
          %713 = vmatpush1.bf16.msra.mxu0 0
          %714 = vmatprep.subr.bf16.mxu0 0
          %715 = vmatpush1.bf16.msra.mxu0 0
          %716 = vmatprep.subr.bf16.mxu0 0
          %717 = vmatpush1.bf16.msra.mxu0 0
          %718 = vmatprep.subr.bf16.mxu0 0
          %719 = vmatpush1.bf16.msra.mxu0 0
          %720 = vmatprep.subr.bf16.mxu0 0
          %721 = vmatpush1.bf16.msra.mxu0 0
          %722 = vmatprep.subr.bf16.mxu0 0
          %723 = vmatpush1.bf16.msra.mxu0 0
          %724 = vmatprep.subr.bf16.mxu0 0
          %725 = vmatpush1.bf16.msra.mxu0 0
          %726 = vmatprep.subr.bf16.mxu0 0
          %727 = vmatpush1.bf16.msra.mxu0 0
          %728 = vmatprep.subr.bf16.mxu0 0
          %729 = vmatpush1.bf16.msra.mxu0 0
          %730 = vmatprep.subr.bf16.mxu0 0
          %731 = vmatpush1.bf16.msra.mxu0 0
          %732 = vmatprep.subr.bf16.mxu0 0
          %733 = vmatpush1.bf16.msra.mxu0 0
          %734 = vmatprep.subr.bf16.mxu0 0
          %735 = vmatpush1.bf16.msra.mxu0 0
          %736 = vmatprep.mubr.bf16.mxu0 0
          %737 = vmatmul.mubr.bf16.gmra.mrb[0].mxu0 %v702
          %v738 = vpop.f32.mrb[0].mxu0
          %v739 = vadd.f32 %v693, %v738
          %v740 = vpop.f32.mrb[0].mxu0
          %v741 = vpop.f32.mrb[0].mxu0
          %v742 = vadd.f32 %v693, %v741
          %v743 = vpop.f32.mrb[0].mxu0
          %744 = vdwg.mxu0
          %745 = vst [vmem:[%s366] sm:$0xff] %v739
          %746 = vst [vmem:[%s366 + $0x8] sm:$0xff] %v742
        $region72: #{tpu_custom_call.1} parent=43 // pred_fallthru
          _
        %s747 = sand.u32 %s195, 1
        %s748 = scalar_lea.sflag [#allocation6], %s747
        %s749 = sand.u32 %s195, 1
        %s750 = smul.addr %s749, 16
        %s751 = scalar_lea.vmem [#allocation12], %s750
        // Predicated region
        $region73: #{tpu_custom_call.1} parent=43 // pred_check
          %p752 = pneg %p205
        $region74: #{tpu_custom_call.1} parent=43 // pred_check_branch
          %754 = sbr.rel (%p752) target = $region76
        $region75: #{tpu_custom_call.1} parent=43 // pred_region
          %p755 = scmp.eq.s32.totalorder %s31, 2
          %s756 = scalar_select %p755, %s32, 0
          %s757 = smul.u32 2, %s756
          %s759 = ssub.s32 256, 256
          %760 = vsyncadd %s748, %s759
          %s761 = smul.addr %s757, 128
          %s762 = scalar_lea.hbm %s6, %s761
          %s763 = sshll.u32 %s751, 4
          %s764 = int_to_ptr.vmem [resolvable:$true] %s763
          %769 = dma.vmem_to_hbm [thread:$0]  %s764, 256, %s762, %s748, 128, 128, 8
        $region76: #{tpu_custom_call.1} parent=43 // pred_fallthru
          _
      $region44: #{tpu_custom_call.1} parent=5 // pred_fallthru
        _
      %p770 = scmp.le.s32.totalorder 2, %s22
      // Predicated region
      $region77: #{tpu_custom_call.1} parent=5 // pred_check
        %p771 = pneg %p770
      $region78: #{tpu_custom_call.1} parent=5 // pred_check_branch
        %773 = sbr.rel (%p771) target = $region80
      $region79: #{tpu_custom_call.1} parent=5 // pred_region
        %s774 = ssub.s32 %s22, 2
        // Predicated region
        $region81: #{tpu_custom_call.1} parent=79 // pred_check
          %p775 = pneg %p211
        $region82: #{tpu_custom_call.1} parent=79 // pred_check_branch
          %777 = sbr.rel (%p775) target = $region84
        $region83: #{tpu_custom_call.1} parent=79 // pred_region
          %s778 = sand.u32 %s196, 1
          %s779 = scalar_lea.sflag [#allocation6], %s778
          %s780 = sand.u32 %s196, 1
          %s781 = smul.addr %s780, 16
          %s782 = scalar_lea.vmem [#allocation12], %s781
          %783 = dma.done %s779, 256
        $region84: #{tpu_custom_call.1} parent=79 // pred_fallthru
          _
      $region80: #{tpu_custom_call.1} parent=5 // pred_fallthru
        _
    $region6: #{tpu_custom_call.1} parent=1 // loop_footer
      %s26 = sadd.s32 1, %s22
    $region7: #{tpu_custom_call.1} parent=1 // loop_footer_branch
      %21 = sbr.rel target = $region3
    $region8: #{tpu_custom_call.1} parent=1 // loop_exit
      _
    %784 = vsyncpa [#allocation5], 1
    %s785 = scalar_lea.sflag [#allocation5], 1
    %786 = vsyncpa %s785, 1
    %787 = vsyncpa [#allocation8], 1
    %s788 = scalar_lea.sflag [#allocation8], 1
    %789 = vsyncpa %s788, 1
    %790 = vsyncpa [#allocation11], 1
    %791 = vsyncpa [#allocation6], 1
    %s792 = scalar_lea.sflag [#allocation6], 1
    %793 = vsyncpa %s792, 1

</llo_original>
